<compile_context>
chip_gen: v5e
topology: v5e:2x2
jax: 0.10.0
libtpu: 0.0.40
codegen_flags: <defaults>
</compile_context>

<pallas_src>
import jax
import jax.numpy as jnp
from jax.experimental import pallas as pl
from jax.experimental.pallas import tpu as pltpu


def _round_up(x: int, m: int) -> int:
    return (x + m - 1) // m * m


# ----------------------------------------------------------------------------
# Kernel
# ----------------------------------------------------------------------------
def _advantage_kernel(x_ref, w1_ref, b1_ref, w2_ref, b2_ref, w3_ref, b3_ref,
                      out_ref):
    # In-kernel f32 -> bf16 cast: keeps x HBM traffic at 4 B/elem (no separate
    # wrapper cast pass) while still feeding bf16 operands to the MXU.
    x = x_ref[...].astype(jnp.bfloat16)                       # [TB, in_dim]

    # layer 1: bf16 x bf16 -> f32 accumulate, then f32 bias + sigmoid (VPU/EUP)
    h = jnp.dot(x, w1_ref[...], preferred_element_type=jnp.float32)
    h = jax.nn.sigmoid(h + b1_ref[...])

    # layer 2
    h = jnp.dot(h.astype(jnp.bfloat16), w2_ref[...],
                preferred_element_type=jnp.float32)
    h = jax.nn.sigmoid(h + b2_ref[...])

    # layer 3 (no activation), true (unpadded) out_dim lanes
    h3 = jnp.dot(h.astype(jnp.bfloat16), w3_ref[...],
                 preferred_element_type=jnp.float32)
    h3 = h3 + b3_ref[...]

    # advantage = h3 - max(h3, axis=-1, keepdims=True)
    m = jnp.max(h3, axis=-1, keepdims=True)
    out_ref[...] = (h3 - m).astype(out_ref.dtype)


# ----------------------------------------------------------------------------
# VMEM accounting + tile selection
# ----------------------------------------------------------------------------
# Target usable VMEM: safely below v7x's 64 MiB physical minus compiler
# scratch; on v5e/v6e (128 MiB) it is simply conservative headroom.
_VMEM_TARGET = 40 * 1024 * 1024


def _tile_bytes(rows: int, cols: int, itemsize: int) -> int:
    """VMEM bytes of one buffered tile, honouring (sublane, lane) padding."""
    sublane = 8 * (4 // itemsize)          # 8 for f32, 16 for bf16
    return (_round_up(max(rows, 1), sublane)
            * _round_up(max(cols, 1), 128) * itemsize)


def _vmem_footprint(tb, in_dim, out_dim, *, x_bufs, w_bufs):
    fp = 0
    fp += x_bufs * _tile_bytes(tb, in_dim, 4)                 # f32 x tiles
    fp += 2 * _tile_bytes(tb, out_dim, 4)                     # f32 out tiles
    fp += w_bufs * (2 * _tile_bytes(in_dim, in_dim, 2)        # w1, w2 (bf16)
                    + _tile_bytes(in_dim, out_dim, 2))        # w3 (bf16)
    fp += w_bufs * (2 * _tile_bytes(1, in_dim, 4)             # b1, b2 (f32)
                    + _tile_bytes(1, out_dim, 4))             # b3 (f32)
    # live intermediates: h1/h2 (f32, in_dim wide) + bf16 casts of x/h1/h2
    # + h3 and (h3 - max) in f32.
    fp += 2 * _tile_bytes(tb, in_dim, 4)
    fp += 3 * _tile_bytes(tb, in_dim, 2)
    fp += 2 * _tile_bytes(tb, out_dim, 4)
    return fp


def _select_tb(batch, in_dim, out_dim, block_b):
    # Balanced tile: grid steps stay large, ragged waste bounded by ~one tile
    # row-quantum instead of up to ~2x with a fixed TB.
    n_blocks = max(1, pl.cdiv(batch, block_b))
    tb = min(_round_up(pl.cdiv(batch, n_blocks), 16), _round_up(batch, 8))
    # v7x megacore: keep >= 2 grid steps whenever the batch allows it.
    while pl.cdiv(batch, tb) < 2 and tb > 16:
        tb = max(16, _round_up(tb // 2, 16))
    # Shrink the tile (not the VMEM limit) until the footprint fits v7x VMEM.
    while tb > 16 and _vmem_footprint(tb, in_dim, out_dim,
                                      x_bufs=3, w_bufs=1) > _VMEM_TARGET:
        tb = max(16, _round_up(tb // 2, 16))
    return tb


# ----------------------------------------------------------------------------
# Wrapper
# ----------------------------------------------------------------------------
def pack_params(params):
    """One-time packing: bf16 weights (pre-transposed [in, out]) + f32 biases.

    Call once outside the inference loop so per-forward calls do no
    wrapper-side weight casts/pads (pure launch + HBM-bandwidth savings).
    """
    return dict(
        w1=params["w1"].astype(jnp.bfloat16),
        b1=params["b1"].astype(jnp.float32).reshape(1, -1),
        w2=params["w2"].astype(jnp.bfloat16),
        b2=params["b2"].astype(jnp.float32).reshape(1, -1),
        w3=params["w3"].astype(jnp.bfloat16),
        b3=params["b3"].astype(jnp.float32).reshape(1, -1),
    )


def advantage_net_forward(x, params, *, block_b: int = 512):
    """x: [B, in_dim] float32.  params: output of pack_params (pre-packed)."""
    if params["w1"].dtype != jnp.bfloat16:   # tolerate unpacked f32 params
        params = pack_params(params)

    batch, in_dim = x.shape
    out_dim = params["w3"].shape[1]

    tb = _select_tb(batch, in_dim, out_dim, block_b)
    grid_steps = pl.cdiv(batch, tb)
    grid = (grid_steps,)

    # Deepen the x pipeline only when the per-step tile is small (short
    # per-step compute exposes DMA issue latency) and the grid is long enough.
    x_bufs = 3 if (_tile_bytes(tb, in_dim, 4) <= (2 << 20)
                   and grid_steps >= 3) else 2

    def build(custom_buffering: bool):
        w_bufs = 1 if custom_buffering else 2
        xb = x_bufs if custom_buffering else 2
        footprint = _vmem_footprint(tb, in_dim, out_dim,
                                    x_bufs=xb, w_bufs=w_bufs)
        # Computed bytes + ~25% headroom (no blanket 2x hedge), clamped to
        # stay inside v7x physical VMEM.
        vmem_limit = min(max(footprint * 5 // 4, 4 << 20), 64 << 20)

        def spec(shape, index_map, bufs=None):
            if custom_buffering and bufs is not None:
                return pl.BlockSpec(shape, index_map,
                                    pipeline_mode=pl.Buffered(bufs))
            return pl.BlockSpec(shape, index_map)

        # Resident weights/biases: constant index_map (never re-fetched) and
        # single-buffered so they cost 1x, not 2x, VMEM.
        const2 = lambda r, c: spec((r, c), lambda i: (0, 0), bufs=1)

        return pl.pallas_call(
            _advantage_kernel,
            out_shape=jax.ShapeDtypeStruct((batch, out_dim), jnp.float32),
            grid=grid,
            in_specs=[
                spec((tb, in_dim), lambda i: (i, 0), bufs=xb),    # x tile
                const2(in_dim, in_dim), const2(1, in_dim),        # w1, b1
                const2(in_dim, in_dim), const2(1, in_dim),        # w2, b2
                const2(in_dim, out_dim), const2(1, out_dim),      # w3, b3
            ],
            out_specs=pl.BlockSpec((tb, out_dim), lambda i: (i, 0)),
            compiler_params=pltpu.CompilerParams(
                dimension_semantics=("parallel",),
                vmem_limit_bytes=vmem_limit,
            ),
        )

    args = (x, params["w1"], params["b1"], params["w2"], params["b2"],
            params["w3"], params["b3"])
    try:
        return build(True)(*args)
    except Exception:
        # Fallback for jax versions without BlockSpec pipeline_mode /
        # pl.Buffered support: default double-buffering for every operand.
        return build(False)(*args)


# ----------------------------------------------------------------------------
# Init + references
# ----------------------------------------------------------------------------
def init_params(key, in_dim, out_dim):
    """Deterministic init mimicking nn.Linear's U(-1/sqrt(fan_in), 1/sqrt(fan_in)).
    Weights stored transposed: [in_features, out_features]."""
    ks = jax.random.split(key, 6)

    def lin(kw, kb, fan_in, fan_out):
        bound = 1.0 / jnp.sqrt(fan_in)
        w = jax.random.uniform(kw, (fan_in, fan_out), jnp.float32, -bound, bound)
        b = jax.random.uniform(kb, (1, fan_out), jnp.float32, -bound, bound)
        return w, b

    w1, b1 = lin(ks[0], ks[1], in_dim, in_dim)
    w2, b2 = lin(ks[2], ks[3], in_dim, in_dim)
    w3, b3 = lin(ks[4], ks[5], in_dim, out_dim)
    return dict(w1=w1, b1=b1, w2=w2, b2=b2, w3=w3, b3=b3)


def _reference_f32(x, p):
    h1 = jax.nn.sigmoid(x @ p["w1"] + p["b1"])
    h2 = jax.nn.sigmoid(h1 @ p["w2"] + p["b2"])
    h3 = h2 @ p["w3"] + p["b3"]
    return h3 - jnp.max(h3, axis=-1, keepdims=True)


def _reference_bf16(x, p):
    bf, f32 = jnp.bfloat16, jnp.float32
    h1 = jax.nn.sigmoid(
        jnp.dot(x.astype(bf), p["w1"].astype(bf), preferred_element_type=f32)
        + p["b1"])
    h2 = jax.nn.sigmoid(
        jnp.dot(h1.astype(bf), p["w2"].astype(bf), preferred_element_type=f32)
        + p["b2"])
    h3 = (jnp.dot(h2.astype(bf), p["w3"].astype(bf), preferred_element_type=f32)
          + p["b3"])
    return h3 - jnp.max(h3, axis=-1, keepdims=True)


if __name__ == "__main__":
    key = jax.random.PRNGKey(0)
    k_x, k_p = jax.random.split(key)

    batch, in_dim, out_dim = 8, 32, 16
    x = jax.random.normal(k_x, (batch, in_dim), jnp.float32)
    params = init_params(k_p, in_dim, out_dim)
    packed = pack_params(params)          # one-time weight packing

    out = advantage_net_forward(x, packed)
    out = jax.block_until_ready(out)
    assert out.shape == (batch, out_dim)

    # Matched-precision reference (bf16 MXU operands, f32 accumulation).
    ref_bf16 = _reference_bf16(x, params)
    assert jnp.allclose(out, ref_bf16, atol=2e-3, rtol=0), \
        "mismatch vs bf16-operand reference"

    # Sanity check vs. the full-f32 PyTorch-equivalent semantics (loose tol
    # accounts for the bf16 matmul operands).
    ref_f32 = _reference_f32(x, params)
    assert jnp.allclose(out, ref_f32, atol=1e-1, rtol=0), \
        "mismatch vs f32 reference"

    print("KERNEL_OK")
</pallas_src>

<mosaic_0001>
module attributes {stable_mosaic.version = 11 : i64} {
  func.func @_advantage_kernel(%arg0: i32, %arg1: memref<8x32xf32, #tpu.memory_space<vmem>>, %arg2: memref<32x32xbf16, #tpu.memory_space<vmem>>, %arg3: memref<1x32xf32, #tpu.memory_space<vmem>>, %arg4: memref<32x32xbf16, #tpu.memory_space<vmem>>, %arg5: memref<1x32xf32, #tpu.memory_space<vmem>>, %arg6: memref<32x16xbf16, #tpu.memory_space<vmem>>, %arg7: memref<1x16xf32, #tpu.memory_space<vmem>>, %arg8: memref<8x16xf32, #tpu.memory_space<vmem>>) attributes {dimension_semantics = [#tpu.dimension_semantics<parallel>], iteration_bounds = array<i64: 1>, scalar_prefetch = 0 : i64, scratch_operands = 0 : i64, tpu.core_type = #tpu.core_type<tc>, window_params = [{pipeline_mode = #tpu.pipeline_mode<double_buffered>, transform_indices = @transform_0, window_bounds = array<i64: 8, 32>}, {pipeline_mode = #tpu.pipeline_mode<synchronous>, transform_indices = @transform_1, window_bounds = array<i64: 32, 32>}, {pipeline_mode = #tpu.pipeline_mode<synchronous>, transform_indices = @transform_2, window_bounds = array<i64: 1, 32>}, {pipeline_mode = #tpu.pipeline_mode<synchronous>, transform_indices = @transform_3, window_bounds = array<i64: 32, 32>}, {pipeline_mode = #tpu.pipeline_mode<synchronous>, transform_indices = @transform_4, window_bounds = array<i64: 1, 32>}, {pipeline_mode = #tpu.pipeline_mode<synchronous>, transform_indices = @transform_5, window_bounds = array<i64: 32, 16>}, {pipeline_mode = #tpu.pipeline_mode<synchronous>, transform_indices = @transform_6, window_bounds = array<i64: 1, 16>}, {transform_indices = @transform_7, window_bounds = array<i64: 8, 16>}]} {
    %c0 = arith.constant 0 : index
    %c0_0 = arith.constant 0 : index
    %0 = vector.load %arg1[%c0, %c0_0] : memref<8x32xf32, #tpu.memory_space<vmem>>, vector<8x32xf32>
    %1 = arith.truncf %0 : vector<8x32xf32> to vector<8x32xbf16>
    %c0_1 = arith.constant 0 : index
    %c0_2 = arith.constant 0 : index
    %2 = vector.load %arg2[%c0_1, %c0_2] : memref<32x32xbf16, #tpu.memory_space<vmem>>, vector<32x32xbf16>
    %cst = arith.constant dense<0.000000e+00> : vector<8x32xf32>
    %3 = tpu.matmul %1, %2, %cst {dimension_numbers = #tpu.dot_dimension_numbers<[1], [0], [0], [1], [0, 0, 1, 1], [], []>} : vector<8x32xbf16>, vector<32x32xbf16>, vector<8x32xf32> -> vector<8x32xf32>
    %c0_3 = arith.constant 0 : index
    %c0_4 = arith.constant 0 : index
    %4 = vector.load %arg3[%c0_3, %c0_4] : memref<1x32xf32, #tpu.memory_space<vmem>>, vector<1x32xf32>
    %5 = vector.broadcast %4 : vector<1x32xf32> to vector<8x32xf32>
    %6 = arith.addf %3, %5 : vector<8x32xf32>
    %7 = arith.negf %6 : vector<8x32xf32>
    %8 = math.exp %7 : vector<8x32xf32>
    %cst_5 = arith.constant 1.000000e+00 : f32
    %9 = vector.broadcast %cst_5 : f32 to vector<8x32xf32>
    %10 = arith.addf %9, %8 : vector<8x32xf32>
    %11 = arith.divf %9, %10 : vector<8x32xf32>
    %12 = arith.truncf %11 : vector<8x32xf32> to vector<8x32xbf16>
    %c0_6 = arith.constant 0 : index
    %c0_7 = arith.constant 0 : index
    %13 = vector.load %arg4[%c0_6, %c0_7] : memref<32x32xbf16, #tpu.memory_space<vmem>>, vector<32x32xbf16>
    %cst_8 = arith.constant dense<0.000000e+00> : vector<8x32xf32>
    %14 = tpu.matmul %12, %13, %cst_8 {dimension_numbers = #tpu.dot_dimension_numbers<[1], [0], [0], [1], [0, 0, 1, 1], [], []>} : vector<8x32xbf16>, vector<32x32xbf16>, vector<8x32xf32> -> vector<8x32xf32>
    %c0_9 = arith.constant 0 : index
    %c0_10 = arith.constant 0 : index
    %15 = vector.load %arg5[%c0_9, %c0_10] : memref<1x32xf32, #tpu.memory_space<vmem>>, vector<1x32xf32>
    %16 = vector.broadcast %15 : vector<1x32xf32> to vector<8x32xf32>
    %17 = arith.addf %14, %16 : vector<8x32xf32>
    %18 = arith.negf %17 : vector<8x32xf32>
    %19 = math.exp %18 : vector<8x32xf32>
    %cst_11 = arith.constant 1.000000e+00 : f32
    %20 = vector.broadcast %cst_11 : f32 to vector<8x32xf32>
    %21 = arith.addf %20, %19 : vector<8x32xf32>
    %22 = arith.divf %20, %21 : vector<8x32xf32>
    %23 = arith.truncf %22 : vector<8x32xf32> to vector<8x32xbf16>
    %c0_12 = arith.constant 0 : index
    %c0_13 = arith.constant 0 : index
    %24 = vector.load %arg6[%c0_12, %c0_13] : memref<32x16xbf16, #tpu.memory_space<vmem>>, vector<32x16xbf16>
    %cst_14 = arith.constant dense<0.000000e+00> : vector<8x16xf32>
    %25 = tpu.matmul %23, %24, %cst_14 {dimension_numbers = #tpu.dot_dimension_numbers<[1], [0], [0], [1], [0, 0, 1, 1], [], []>} : vector<8x32xbf16>, vector<32x16xbf16>, vector<8x16xf32> -> vector<8x16xf32>
    %c0_15 = arith.constant 0 : index
    %c0_16 = arith.constant 0 : index
    %26 = vector.load %arg7[%c0_15, %c0_16] : memref<1x16xf32, #tpu.memory_space<vmem>>, vector<1x16xf32>
    %27 = vector.broadcast %26 : vector<1x16xf32> to vector<8x16xf32>
    %28 = arith.addf %25, %27 : vector<8x16xf32>
    %cst_17 = arith.constant dense<0xFF800000> : vector<8xf32>
    %29 = vector.multi_reduction <maximumf>, %28, %cst_17 [1] : vector<8x16xf32> to vector<8xf32>
    %30 = vector.shape_cast %29 : vector<8xf32> to vector<8x1xf32>
    %31 = vector.broadcast %30 : vector<8x1xf32> to vector<8x16xf32>
    %32 = arith.subf %28, %31 : vector<8x16xf32>
    %c0_18 = arith.constant 0 : index
    %c0_19 = arith.constant 0 : index
    %33 = vector.load %arg8[%c0_18, %c0_19] : memref<8x16xf32, #tpu.memory_space<vmem>>, vector<8x16xf32>
    tpu.vector_store %arg8[%c0_18, %c0_19], %32 {strides = array<i32>} : memref<8x16xf32, #tpu.memory_space<vmem>>, vector<8x16xf32>,
    return
  }
  func.func @transform_0(%arg0: i32) -> (i32, i32) {
    %c0_i32 = arith.constant 0 : i32
    %c0_i32_0 = arith.constant 0 : i32
    return %arg0, %c0_i32 : i32, i32
  }
  func.func @transform_1(%arg0: i32) -> (i32, i32) {
    %c0_i32 = arith.constant 0 : i32
    %c0_i32_0 = arith.constant 0 : i32
    %c0_i32_1 = arith.constant 0 : i32
    return %c0_i32, %c0_i32_0 : i32, i32
  }
  func.func @transform_2(%arg0: i32) -> (i32, i32) {
    %c0_i32 = arith.constant 0 : i32
    %c0_i32_0 = arith.constant 0 : i32
    %c0_i32_1 = arith.constant 0 : i32
    return %c0_i32, %c0_i32_0 : i32, i32
  }
  func.func @transform_3(%arg0: i32) -> (i32, i32) {
    %c0_i32 = arith.constant 0 : i32
    %c0_i32_0 = arith.constant 0 : i32
    %c0_i32_1 = arith.constant 0 : i32
    return %c0_i32, %c0_i32_0 : i32, i32
  }
  func.func @transform_4(%arg0: i32) -> (i32, i32) {
    %c0_i32 = arith.constant 0 : i32
    %c0_i32_0 = arith.constant 0 : i32
    %c0_i32_1 = arith.constant 0 : i32
    return %c0_i32, %c0_i32_0 : i32, i32
  }
  func.func @transform_5(%arg0: i32) -> (i32, i32) {
    %c0_i32 = arith.constant 0 : i32
    %c0_i32_0 = arith.constant 0 : i32
    %c0_i32_1 = arith.constant 0 : i32
    return %c0_i32, %c0_i32_0 : i32, i32
  }
  func.func @transform_6(%arg0: i32) -> (i32, i32) {
    %c0_i32 = arith.constant 0 : i32
    %c0_i32_0 = arith.constant 0 : i32
    %c0_i32_1 = arith.constant 0 : i32
    return %c0_i32, %c0_i32_0 : i32, i32
  }
  func.func @transform_7(%arg0: i32) -> (i32, i32) {
    %c0_i32 = arith.constant 0 : i32
    %c0_i32_0 = arith.constant 0 : i32
    return %arg0, %c0_i32 : i32, i32
  }
}

module attributes {stable_mosaic.version = 11 : i64} {
  func.func @_advantage_kernel(%arg0: i32, %arg1: memref<8x32xf32, #tpu.memory_space<vmem>>, %arg2: memref<32x32xbf16, #tpu.memory_space<vmem>>, %arg3: memref<1x32xf32, #tpu.memory_space<vmem>>, %arg4: memref<32x32xbf16, #tpu.memory_space<vmem>>, %arg5: memref<1x32xf32, #tpu.memory_space<vmem>>, %arg6: memref<32x16xbf16, #tpu.memory_space<vmem>>, %arg7: memref<1x16xf32, #tpu.memory_space<vmem>>, %arg8: memref<8x16xf32, #tpu.memory_space<vmem>>) attributes {dimension_semantics = [#tpu.dimension_semantics<parallel>], iteration_bounds = array<i64: 1>, scalar_prefetch = 0 : i64, scratch_operands = 0 : i64, tpu.core_type = #tpu.core_type<tc>, window_params = [{transform_indices = @transform_0, window_bounds = array<i64: 8, 32>}, {pipeline_mode = #tpu.pipeline_mode<synchronous>, transform_indices = @transform_1, window_bounds = array<i64: 32, 32>}, {pipeline_mode = #tpu.pipeline_mode<synchronous>, transform_indices = @transform_2, window_bounds = array<i64: 1, 32>}, {pipeline_mode = #tpu.pipeline_mode<synchronous>, transform_indices = @transform_3, window_bounds = array<i64: 32, 32>}, {pipeline_mode = #tpu.pipeline_mode<synchronous>, transform_indices = @transform_4, window_bounds = array<i64: 1, 32>}, {pipeline_mode = #tpu.pipeline_mode<synchronous>, transform_indices = @transform_5, window_bounds = array<i64: 32, 16>}, {pipeline_mode = #tpu.pipeline_mode<synchronous>, transform_indices = @transform_6, window_bounds = array<i64: 1, 16>}, {transform_indices = @transform_7, window_bounds = array<i64: 8, 16>}]} {
    %c0 = arith.constant 0 : index
    %c0_0 = arith.constant 0 : index
    %0 = vector.load %arg1[%c0, %c0_0] : memref<8x32xf32, #tpu.memory_space<vmem>>, vector<8x32xf32>
    %1 = arith.truncf %0 : vector<8x32xf32> to vector<8x32xbf16>
    %c0_1 = arith.constant 0 : index
    %c0_2 = arith.constant 0 : index
    %2 = vector.load %arg2[%c0_1, %c0_2] : memref<32x32xbf16, #tpu.memory_space<vmem>>, vector<32x32xbf16>
    %cst = arith.constant dense<0.000000e+00> : vector<8x32xf32>
    %3 = tpu.matmul %1, %2, %cst {dimension_numbers = #tpu.dot_dimension_numbers<[1], [0], [0], [1], [0, 0, 1, 1], [], []>} : vector<8x32xbf16>, vector<32x32xbf16>, vector<8x32xf32> -> vector<8x32xf32>
    %c0_3 = arith.constant 0 : index
    %c0_4 = arith.constant 0 : index
    %4 = vector.load %arg3[%c0_3, %c0_4] : memref<1x32xf32, #tpu.memory_space<vmem>>, vector<1x32xf32>
    %5 = vector.broadcast %4 : vector<1x32xf32> to vector<8x32xf32>
    %6 = arith.addf %3, %5 : vector<8x32xf32>
    %7 = arith.negf %6 : vector<8x32xf32>
    %8 = math.exp %7 : vector<8x32xf32>
    %cst_5 = arith.constant 1.000000e+00 : f32
    %9 = vector.broadcast %cst_5 : f32 to vector<8x32xf32>
    %10 = arith.addf %9, %8 : vector<8x32xf32>
    %11 = arith.divf %9, %10 : vector<8x32xf32>
    %12 = arith.truncf %11 : vector<8x32xf32> to vector<8x32xbf16>
    %c0_6 = arith.constant 0 : index
    %c0_7 = arith.constant 0 : index
    %13 = vector.load %arg4[%c0_6, %c0_7] : memref<32x32xbf16, #tpu.memory_space<vmem>>, vector<32x32xbf16>
    %cst_8 = arith.constant dense<0.000000e+00> : vector<8x32xf32>
    %14 = tpu.matmul %12, %13, %cst_8 {dimension_numbers = #tpu.dot_dimension_numbers<[1], [0], [0], [1], [0, 0, 1, 1], [], []>} : vector<8x32xbf16>, vector<32x32xbf16>, vector<8x32xf32> -> vector<8x32xf32>
    %c0_9 = arith.constant 0 : index
    %c0_10 = arith.constant 0 : index
    %15 = vector.load %arg5[%c0_9, %c0_10] : memref<1x32xf32, #tpu.memory_space<vmem>>, vector<1x32xf32>
    %16 = vector.broadcast %15 : vector<1x32xf32> to vector<8x32xf32>
    %17 = arith.addf %14, %16 : vector<8x32xf32>
    %18 = arith.negf %17 : vector<8x32xf32>
    %19 = math.exp %18 : vector<8x32xf32>
    %cst_11 = arith.constant 1.000000e+00 : f32
    %20 = vector.broadcast %cst_11 : f32 to vector<8x32xf32>
    %21 = arith.addf %20, %19 : vector<8x32xf32>
    %22 = arith.divf %20, %21 : vector<8x32xf32>
    %23 = arith.truncf %22 : vector<8x32xf32> to vector<8x32xbf16>
    %c0_12 = arith.constant 0 : index
    %c0_13 = arith.constant 0 : index
    %24 = vector.load %arg6[%c0_12, %c0_13] : memref<32x16xbf16, #tpu.memory_space<vmem>>, vector<32x16xbf16>
    %cst_14 = arith.constant dense<0.000000e+00> : vector<8x16xf32>
    %25 = tpu.matmul %23, %24, %cst_14 {dimension_numbers = #tpu.dot_dimension_numbers<[1], [0], [0], [1], [0, 0, 1, 1], [], []>} : vector<8x32xbf16>, vector<32x16xbf16>, vector<8x16xf32> -> vector<8x16xf32>
    %c0_15 = arith.constant 0 : index
    %c0_16 = arith.constant 0 : index
    %26 = vector.load %arg7[%c0_15, %c0_16] : memref<1x16xf32, #tpu.memory_space<vmem>>, vector<1x16xf32>
    %27 = vector.broadcast %26 : vector<1x16xf32> to vector<8x16xf32>
    %28 = arith.addf %25, %27 : vector<8x16xf32>
    %cst_17 = arith.constant dense<0xFF800000> : vector<8xf32>
    %29 = vector.multi_reduction <maximumf>, %28, %cst_17 [1] : vector<8x16xf32> to vector<8xf32>
    %30 = vector.shape_cast %29 : vector<8xf32> to vector<8x1xf32>
    %31 = vector.broadcast %30 : vector<8x1xf32> to vector<8x16xf32>
    %32 = arith.subf %28, %31 : vector<8x16xf32>
    %c0_18 = arith.constant 0 : index
    %c0_19 = arith.constant 0 : index
    %33 = vector.load %arg8[%c0_18, %c0_19] : memref<8x16xf32, #tpu.memory_space<vmem>>, vector<8x16xf32>
    tpu.vector_store %arg8[%c0_18, %c0_19], %32 {strides = array<i32>} : memref<8x16xf32, #tpu.memory_space<vmem>>, vector<8x16xf32>,
    return
  }
  func.func @transform_0(%arg0: i32) -> (i32, i32) {
    %c0_i32 = arith.constant 0 : i32
    %c0_i32_0 = arith.constant 0 : i32
    return %arg0, %c0_i32 : i32, i32
  }
  func.func @transform_1(%arg0: i32) -> (i32, i32) {
    %c0_i32 = arith.constant 0 : i32
    %c0_i32_0 = arith.constant 0 : i32
    %c0_i32_1 = arith.constant 0 : i32
    return %c0_i32, %c0_i32_0 : i32, i32
  }
  func.func @transform_2(%arg0: i32) -> (i32, i32) {
    %c0_i32 = arith.constant 0 : i32
    %c0_i32_0 = arith.constant 0 : i32
    %c0_i32_1 = arith.constant 0 : i32
    return %c0_i32, %c0_i32_0 : i32, i32
  }
  func.func @transform_3(%arg0: i32) -> (i32, i32) {
    %c0_i32 = arith.constant 0 : i32
    %c0_i32_0 = arith.constant 0 : i32
    %c0_i32_1 = arith.constant 0 : i32
    return %c0_i32, %c0_i32_0 : i32, i32
  }
  func.func @transform_4(%arg0: i32) -> (i32, i32) {
    %c0_i32 = arith.constant 0 : i32
    %c0_i32_0 = arith.constant 0 : i32
    %c0_i32_1 = arith.constant 0 : i32
    return %c0_i32, %c0_i32_0 : i32, i32
  }
  func.func @transform_5(%arg0: i32) -> (i32, i32) {
    %c0_i32 = arith.constant 0 : i32
    %c0_i32_0 = arith.constant 0 : i32
    %c0_i32_1 = arith.constant 0 : i32
    return %c0_i32, %c0_i32_0 : i32, i32
  }
  func.func @transform_6(%arg0: i32) -> (i32, i32) {
    %c0_i32 = arith.constant 0 : i32
    %c0_i32_0 = arith.constant 0 : i32
    %c0_i32_1 = arith.constant 0 : i32
    return %c0_i32, %c0_i32_0 : i32, i32
  }
  func.func @transform_7(%arg0: i32) -> (i32, i32) {
    %c0_i32 = arith.constant 0 : i32
    %c0_i32_0 = arith.constant 0 : i32
    return %arg0, %c0_i32 : i32, i32
  }
}

</mosaic_0001>

<llo_original>
// kernel: tpu_custom_call.1
$region0: #{tpu_custom_call.1}
  #allocation0 [shape = 'u32[]', space=smem, size = 0x4, offset = 0x4, fixed_abs, tag = 'smem constant byte address 0x4 - core index']
  #allocation1 [shape = 'u32[72,128]{1,0:T(1,128)}', space=vmem, size = 0x9000, scoped, tag = 'internal scratch']
  %s0 = inlined_call_operand.vmem [shape: f32[8,32], index: 0, kind: input, shape index: {}]
  %s1 = inlined_call_operand.vmem [shape: bf16[32,32], index: 1, kind: input, shape index: {}]
  %s2 = inlined_call_operand.vmem [shape: f32[1,32], index: 2, kind: input, shape index: {}]
  %s3 = inlined_call_operand.hbm [shape: bf16[32,32], index: 3, kind: input, shape index: {}]
  %s4 = inlined_call_operand.vmem [shape: f32[1,32], index: 4, kind: input, shape index: {}]
  %s5 = inlined_call_operand.vmem [shape: bf16[32,16], index: 5, kind: input, shape index: {}]
  %s6 = inlined_call_operand.vmem [shape: f32[1,16], index: 6, kind: input, shape index: {}]
  %s7 = inlined_call_operand.hbm [shape: f32[8,16], index: 7, kind: output, shape index: {}]
  %s8 = sld [smem:[#allocation0]]
  $region42: #{tpu_custom_call.1} parent=0
    _
  %s10 = ssub.s32 1, %s8
  %s11 = scalar_select 0, %s10, %s8
  $region1: #{tpu_custom_call.1} parent=0
    #allocation2 [shape = 'u8[8192]{0}', space=vmem, size = 0x2000, scoped, tag = 'input window, operand 3, single buffered']
    #allocation3 [shape = 's32[1]{0}', space=sflag, size = 0x4, scoped, tag = 'scoped memory for tpu_custom_call.1']
    #allocation4 [shape = 's32[1]{0}', space=sflag, size = 0x4, scoped, tag = 'scoped memory for tpu_custom_call.1']
    #allocation5 [shape = 'u8[4096]{0}', space=vmem, size = 0x1000, scoped, tag = 'output window, operand 0, single buffered']
    %12 = vsyncpa [#allocation3], 0
    %13 = vsyncpa [#allocation4], 0
    // Predicated region
    $region2: #{tpu_custom_call.1} parent=1 // pred_check
      _
    $region3: #{tpu_custom_call.1} parent=1 // pred_check_branch
      %15 = sbr.rel (0) target = $region5
    $region4: #{tpu_custom_call.1} parent=1 // pred_region
      _
    $region5: #{tpu_custom_call.1} parent=1 // pred_fallthru
      _
    // Predicated region
    $region6: #{tpu_custom_call.1} parent=1 // pred_check
      _
    $region7: #{tpu_custom_call.1} parent=1 // pred_check_branch
      %17 = sbr.rel (0) target = $region9
    $region8: #{tpu_custom_call.1} parent=1 // pred_region
      _
    $region9: #{tpu_custom_call.1} parent=1 // pred_fallthru
      _
    // Predicated region
    $region10: #{tpu_custom_call.1} parent=1 // pred_check
      _
    $region11: #{tpu_custom_call.1} parent=1 // pred_check_branch
      %19 = sbr.rel (0) target = $region13
    $region12: #{tpu_custom_call.1} parent=1 // pred_region
      _
    $region13: #{tpu_custom_call.1} parent=1 // pred_fallthru
      _
    // Predicated region
    $region14: #{tpu_custom_call.1} parent=1 // pred_check
      _
    $region15: #{tpu_custom_call.1} parent=1 // pred_check_branch
      %21 = sbr.rel (0) target = $region17
    $region16: #{tpu_custom_call.1} parent=1 // pred_region
      %23 = vsyncadd [#allocation3], 0
      %s24 = sshll.u32 %s3, 4
      %s25 = int_to_ptr.hbm [resolvable:$true] %s24
      %s26 = sshll.u32 [#allocation2], 4
      %s27 = int_to_ptr.vmem [resolvable:$true] %s26
      %32 = dma.hbm_to_vmem [thread:$0]  %s25, 256, %s27, [#allocation3], 64, 64, 4
    $region17: #{tpu_custom_call.1} parent=1 // pred_fallthru
      _
    // Predicated region
    $region18: #{tpu_custom_call.1} parent=1 // pred_check
      _
    $region19: #{tpu_custom_call.1} parent=1 // pred_check_branch
      %34 = sbr.rel (0) target = $region21
    $region20: #{tpu_custom_call.1} parent=1 // pred_region
      _
    $region21: #{tpu_custom_call.1} parent=1 // pred_fallthru
      _
    // Predicated region
    $region22: #{tpu_custom_call.1} parent=1 // pred_check
      _
    $region23: #{tpu_custom_call.1} parent=1 // pred_check_branch
      %36 = sbr.rel (0) target = $region25
    $region24: #{tpu_custom_call.1} parent=1 // pred_region
      _
    $region25: #{tpu_custom_call.1} parent=1 // pred_fallthru
      _
    // Predicated region
    $region26: #{tpu_custom_call.1} parent=1 // pred_check
      _
    $region27: #{tpu_custom_call.1} parent=1 // pred_check_branch
      %38 = sbr.rel (0) target = $region29
    $region28: #{tpu_custom_call.1} parent=1 // pred_region
      _
    $region29: #{tpu_custom_call.1} parent=1 // pred_fallthru
      _
    // Predicated region
    $region30: #{tpu_custom_call.1} parent=1 // pred_check
      _
    $region31: #{tpu_custom_call.1} parent=1 // pred_check_branch
      %40 = sbr.rel (0) target = $region33
    $region32: #{tpu_custom_call.1} parent=1 // pred_region
      %42 = dma.done [#allocation3], 256
    $region33: #{tpu_custom_call.1} parent=1 // pred_fallthru
      _
    %v44 = vld [vmem:[%s0] sm:$0xff]
    %v45 = vpack.c.bf16 %v44, %v44
    %v46 = vld [vmem:[%s1] sm:$0xf]
    %v47 = vld [vmem:[%s1 + $0x4] sm:$0xf]
    %v48 = vld [vmem:[%s1 + $0x8] sm:$0xf]
    %v49 = vld [vmem:[%s1 + $0xc] sm:$0xf]
    %v50 = vld [vmem:[%s2] sm:$0x1]
    %v52 = vperm.slane %v50, 0
    %v58 = vunpack.c.l.b16 %v46
    %v59 = vunpack.c.l.b16 %v47
    %v60 = vunpack.c.l.b16 %v48
    %v61 = vunpack.c.l.b16 %v49
    %v62 = vpack.c.b16 %v59, %v58
    %v63 = vpack.c.b16 %v61, %v60
    %vm66 = vcmask 261120
    %v68 = vsel %vm66, %v45, 0
    %70 = vmatpush.bf16.msra.mxu0 0
    %71 = vmatpush.bf16.msra.mxu0 0
    %72 = vmatpush.bf16.msra.mxu0 0
    %73 = vmatpush.bf16.msra.mxu0 0
    %74 = vmatpush.bf16.msra.mxu0 0
    %75 = vmatpush.bf16.msra.mxu0 0
    %76 = vmatpush.bf16.msra.mxu0 %v63
    %77 = vmatpush.bf16.msra.mxu0 %v62
    %78 = vmatmul.bf16.gmra.mxu0 %v68
    %v79 = vpop.f32.mrf.mxu0
    %v80 = vadd.f32 %v52, %v79
    %v81 = vpop.f32.mrf.mxu0
    %82 = vdwg.mxu0
    %v83 = vxor.u32 %v80, 2147483648
    %v84 = vmul.f32 %v83, 1.442695
    %v85 = vpow.pop %v84
    %v86 = vadd.f32 %v85, 1.0
    %v87 = vrcp.pop %v86
    %v88 = vmul.f32 %v86, %v87
    %v89 = vsub.f32 1.0, %v88
    %v90 = vmul.f32 %v87, %v89
    %v91 = vadd.f32 %v87, %v90
    %vm92 = vweird.f32 %v86
    %vm93 = vweird.f32 %v87
    %vm94 = vmor %vm92, %vm93
    %v95 = vsel %vm94, %v87, %v91
    %v96 = vand.u32 2147483647, %v86
    %vm97 = vcmp.eq.f32.partialorder %v96, 8.507059e+37
    %v98 = vand.u32 %v86, 2147483648
    %v99 = vor.u32 1.1754944e-38, %v98
    %v100 = vsel %vm97, %v99, %v95
    %v101 = vmul.f32 1.0, %v100
    %v102 = vpack.c.bf16 %v101, %v101
    %v103 = vld [vmem:[#allocation2] sm:$0xf]
    %v104 = vld [vmem:[#allocation2 + $0x4] sm:$0xf]
    %v105 = vld [vmem:[#allocation2 + $0x8] sm:$0xf]
    %v106 = vld [vmem:[#allocation2 + $0xc] sm:$0xf]
    %v107 = vld [vmem:[%s4] sm:$0x1]
    %v109 = vperm.slane %v107, 0
    %v115 = vunpack.c.l.b16 %v103
    %v116 = vunpack.c.l.b16 %v104
    %v117 = vunpack.c.l.b16 %v105
    %v118 = vunpack.c.l.b16 %v106
    %v119 = vpack.c.b16 %v116, %v115
    %v120 = vpack.c.b16 %v118, %v117
    %v124 = vsel %vm66, %v102, 0
    %126 = vmatpush.bf16.msra.mxu0 0
    %127 = vmatpush.bf16.msra.mxu0 0
    %128 = vmatpush.bf16.msra.mxu0 0
    %129 = vmatpush.bf16.msra.mxu0 0
    %130 = vmatpush.bf16.msra.mxu0 0
    %131 = vmatpush.bf16.msra.mxu0 0
    %132 = vmatpush.bf16.msra.mxu0 %v120
    %133 = vmatpush.bf16.msra.mxu0 %v119
    %134 = vmatmul.bf16.gmra.mxu0 %v124
    %v135 = vpop.f32.mrf.mxu0
    %v136 = vadd.f32 %v109, %v135
    %v137 = vpop.f32.mrf.mxu0
    %138 = vdwg.mxu0
    %v139 = vxor.u32 %v136, 2147483648
    %v140 = vmul.f32 %v139, 1.442695
    %v141 = vpow.pop %v140
    %v142 = vadd.f32 %v141, 1.0
    %v143 = vrcp.pop %v142
    %v144 = vmul.f32 %v142, %v143
    %v145 = vsub.f32 1.0, %v144
    %v146 = vmul.f32 %v143, %v145
    %v147 = vadd.f32 %v143, %v146
    %vm148 = vweird.f32 %v142
    %vm149 = vweird.f32 %v143
    %vm150 = vmor %vm148, %vm149
    %v151 = vsel %vm150, %v143, %v147
    %v152 = vand.u32 2147483647, %v142
    %vm153 = vcmp.eq.f32.partialorder %v152, 8.507059e+37
    %v154 = vand.u32 %v142, 2147483648
    %v155 = vor.u32 1.1754944e-38, %v154
    %v156 = vsel %vm153, %v155, %v151
    %v157 = vmul.f32 1.0, %v156
    %v158 = vpack.c.bf16 %v157, %v157
    %v159 = vld [vmem:[%s5] sm:$0xf]
    %v160 = vld [vmem:[%s5 + $0x4] sm:$0xf]
    %v161 = vld [vmem:[%s5 + $0x8] sm:$0xf]
    %v162 = vld [vmem:[%s5 + $0xc] sm:$0xf]
    %v163 = vld [vmem:[%s6] sm:$0x1]
    %v165 = vperm.slane %v163, 0
    %v171 = vunpack.c.l.b16 %v159
    %v172 = vunpack.c.l.b16 %v160
    %v173 = vunpack.c.l.b16 %v161
    %v174 = vunpack.c.l.b16 %v162
    %v175 = vpack.c.b16 %v172, %v171
    %v176 = vpack.c.b16 %v174, %v173
    %v180 = vsel %vm66, %v158, 0
    %182 = vmatpush.bf16.msra.mxu0 0
    %183 = vmatpush.bf16.msra.mxu0 0
    %184 = vmatpush.bf16.msra.mxu0 0
    %185 = vmatpush.bf16.msra.mxu0 0
    %186 = vmatpush.bf16.msra.mxu0 0
    %187 = vmatpush.bf16.msra.mxu0 0
    %188 = vmatpush.bf16.msra.mxu0 %v176
    %189 = vmatpush.bf16.msra.mxu0 %v175
    %190 = vmatmul.bf16.gmra.mxu0 %v180
    %v191 = vpop.f32.mrf.mxu0
    %v192 = vadd.f32 %v165, %v191
    %v193 = vpop.f32.mrf.mxu0
    %194 = vdwg.mxu0
    %vm195 = vcmask 130048
    %v196 = vsel %vm195, %v192, -inf
    %197 = vmax.xlane.f32.xlu0 %v196
    %v198 = vpop.xlane.xlu0 %197
    %v199 = vsub.f32 %v192, %v198
    %200 = vst.msk [vmem:[#allocation5] sm:$0xff] %vm195, %v199
    // Predicated region
    $region34: #{tpu_custom_call.1} parent=1 // pred_check
      _
    $region35: #{tpu_custom_call.1} parent=1 // pred_check_branch
      %202 = sbr.rel (0) target = $region37
    $region36: #{tpu_custom_call.1} parent=1 // pred_region
      %204 = vsyncadd [#allocation4], 0
      %s206 = sshll.u32 [#allocation5], 4
      %s207 = int_to_ptr.vmem [resolvable:$true] %s206
      %s208 = sshll.u32 %s7, 4
      %s209 = int_to_ptr.hbm [resolvable:$true] %s208
      %211 = dma.vmem_to_hbm [thread:$0]  %s207, 128, %s209, [#allocation4]
    $region37: #{tpu_custom_call.1} parent=1 // pred_fallthru
      _
    // Predicated region
    $region38: #{tpu_custom_call.1} parent=1 // pred_check
      _
    $region39: #{tpu_custom_call.1} parent=1 // pred_check_branch
      %213 = sbr.rel (0) target = $region41
    $region40: #{tpu_custom_call.1} parent=1 // pred_region
      %215 = dma.done [#allocation4], 128
    $region41: #{tpu_custom_call.1} parent=1 // pred_fallthru
      _
    %216 = vsyncpa [#allocation3], 1
    %217 = vsyncpa [#allocation4], 1

// kernel: tpu_custom_call.1
$region0: #{tpu_custom_call.1}
  #allocation0 [shape = 'u32[]', space=smem, size = 0x4, offset = 0x4, fixed_abs, tag = 'smem constant byte address 0x4 - core index']
  #allocation1 [shape = 'u32[72,128]{1,0:T(1,128)}', space=vmem, size = 0x9000, scoped, tag = 'internal scratch']
  %s0 = inlined_call_operand.vmem [shape: f32[8,32], index: 0, kind: input, shape index: {}]
  %s1 = inlined_call_operand.vmem [shape: bf16[32,32], index: 1, kind: input, shape index: {}]
  %s2 = inlined_call_operand.vmem [shape: f32[1,32], index: 2, kind: input, shape index: {}]
  %s3 = inlined_call_operand.hbm [shape: bf16[32,32], index: 3, kind: input, shape index: {}]
  %s4 = inlined_call_operand.vmem [shape: f32[1,32], index: 4, kind: input, shape index: {}]
  %s5 = inlined_call_operand.vmem [shape: bf16[32,16], index: 5, kind: input, shape index: {}]
  %s6 = inlined_call_operand.vmem [shape: f32[1,16], index: 6, kind: input, shape index: {}]
  %s7 = inlined_call_operand.hbm [shape: f32[8,16], index: 7, kind: output, shape index: {}]
  %s8 = sld [smem:[#allocation0]]
  $region42: #{tpu_custom_call.1} parent=0
    _
  %s10 = ssub.s32 1, %s8
  %s11 = scalar_select 0, %s10, %s8
  $region1: #{tpu_custom_call.1} parent=0
    #allocation2 [shape = 'u8[8192]{0}', space=vmem, size = 0x2000, scoped, tag = 'input window, operand 3, single buffered']
    #allocation3 [shape = 's32[1]{0}', space=sflag, size = 0x4, scoped, tag = 'scoped memory for tpu_custom_call.1']
    #allocation4 [shape = 's32[1]{0}', space=sflag, size = 0x4, scoped, tag = 'scoped memory for tpu_custom_call.1']
    #allocation5 [shape = 'u8[4096]{0}', space=vmem, size = 0x1000, scoped, tag = 'output window, operand 0, single buffered']
    %12 = vsyncpa [#allocation3], 0
    %13 = vsyncpa [#allocation4], 0
    // Predicated region
    $region2: #{tpu_custom_call.1} parent=1 // pred_check
      _
    $region3: #{tpu_custom_call.1} parent=1 // pred_check_branch
      %15 = sbr.rel (0) target = $region5
    $region4: #{tpu_custom_call.1} parent=1 // pred_region
      _
    $region5: #{tpu_custom_call.1} parent=1 // pred_fallthru
      _
    // Predicated region
    $region6: #{tpu_custom_call.1} parent=1 // pred_check
      _
    $region7: #{tpu_custom_call.1} parent=1 // pred_check_branch
      %17 = sbr.rel (0) target = $region9
    $region8: #{tpu_custom_call.1} parent=1 // pred_region
      _
    $region9: #{tpu_custom_call.1} parent=1 // pred_fallthru
      _
    // Predicated region
    $region10: #{tpu_custom_call.1} parent=1 // pred_check
      _
    $region11: #{tpu_custom_call.1} parent=1 // pred_check_branch
      %19 = sbr.rel (0) target = $region13
    $region12: #{tpu_custom_call.1} parent=1 // pred_region
      _
    $region13: #{tpu_custom_call.1} parent=1 // pred_fallthru
      _
    // Predicated region
    $region14: #{tpu_custom_call.1} parent=1 // pred_check
      _
    $region15: #{tpu_custom_call.1} parent=1 // pred_check_branch
      %21 = sbr.rel (0) target = $region17
    $region16: #{tpu_custom_call.1} parent=1 // pred_region
      %23 = vsyncadd [#allocation3], 0
      %s24 = sshll.u32 %s3, 4
      %s25 = int_to_ptr.hbm [resolvable:$true] %s24
      %s26 = sshll.u32 [#allocation2], 4
      %s27 = int_to_ptr.vmem [resolvable:$true] %s26
      %32 = dma.hbm_to_vmem [thread:$0]  %s25, 256, %s27, [#allocation3], 64, 64, 4
    $region17: #{tpu_custom_call.1} parent=1 // pred_fallthru
      _
    // Predicated region
    $region18: #{tpu_custom_call.1} parent=1 // pred_check
      _
    $region19: #{tpu_custom_call.1} parent=1 // pred_check_branch
      %34 = sbr.rel (0) target = $region21
    $region20: #{tpu_custom_call.1} parent=1 // pred_region
      _
    $region21: #{tpu_custom_call.1} parent=1 // pred_fallthru
      _
    // Predicated region
    $region22: #{tpu_custom_call.1} parent=1 // pred_check
      _
    $region23: #{tpu_custom_call.1} parent=1 // pred_check_branch
      %36 = sbr.rel (0) target = $region25
    $region24: #{tpu_custom_call.1} parent=1 // pred_region
      _
    $region25: #{tpu_custom_call.1} parent=1 // pred_fallthru
      _
    // Predicated region
    $region26: #{tpu_custom_call.1} parent=1 // pred_check
      _
    $region27: #{tpu_custom_call.1} parent=1 // pred_check_branch
      %38 = sbr.rel (0) target = $region29
    $region28: #{tpu_custom_call.1} parent=1 // pred_region
      _
    $region29: #{tpu_custom_call.1} parent=1 // pred_fallthru
      _
    // Predicated region
    $region30: #{tpu_custom_call.1} parent=1 // pred_check
      _
    $region31: #{tpu_custom_call.1} parent=1 // pred_check_branch
      %40 = sbr.rel (0) target = $region33
    $region32: #{tpu_custom_call.1} parent=1 // pred_region
      %42 = dma.done [#allocation3], 256
    $region33: #{tpu_custom_call.1} parent=1 // pred_fallthru
      _
    %v44 = vld [vmem:[%s0] sm:$0xff]
    %v45 = vpack.c.bf16 %v44, %v44
    %v46 = vld [vmem:[%s1] sm:$0xf]
    %v47 = vld [vmem:[%s1 + $0x4] sm:$0xf]
    %v48 = vld [vmem:[%s1 + $0x8] sm:$0xf]
    %v49 = vld [vmem:[%s1 + $0xc] sm:$0xf]
    %v50 = vld [vmem:[%s2] sm:$0x1]
    %v52 = vperm.slane %v50, 0
    %v58 = vunpack.c.l.b16 %v46
    %v59 = vunpack.c.l.b16 %v47
    %v60 = vunpack.c.l.b16 %v48
    %v61 = vunpack.c.l.b16 %v49
    %v62 = vpack.c.b16 %v59, %v58
    %v63 = vpack.c.b16 %v61, %v60
    %vm66 = vcmask 261120
    %v68 = vsel %vm66, %v45, 0
    %70 = vmatpush.bf16.msra.mxu0 0
    %71 = vmatpush.bf16.msra.mxu0 0
    %72 = vmatpush.bf16.msra.mxu0 0
    %73 = vmatpush.bf16.msra.mxu0 0
    %74 = vmatpush.bf16.msra.mxu0 0
    %75 = vmatpush.bf16.msra.mxu0 0
    %76 = vmatpush.bf16.msra.mxu0 %v63
    %77 = vmatpush.bf16.msra.mxu0 %v62
    %78 = vmatmul.bf16.gmra.mxu0 %v68
    %v79 = vpop.f32.mrf.mxu0
    %v80 = vadd.f32 %v52, %v79
    %v81 = vpop.f32.mrf.mxu0
    %82 = vdwg.mxu0
    %v83 = vxor.u32 %v80, 2147483648
    %v84 = vmul.f32 %v83, 1.442695
    %v85 = vpow.pop %v84
    %v86 = vadd.f32 %v85, 1.0
    %v87 = vrcp.pop %v86
    %v88 = vmul.f32 %v86, %v87
    %v89 = vsub.f32 1.0, %v88
    %v90 = vmul.f32 %v87, %v89
    %v91 = vadd.f32 %v87, %v90
    %vm92 = vweird.f32 %v86
    %vm93 = vweird.f32 %v87
    %vm94 = vmor %vm92, %vm93
    %v95 = vsel %vm94, %v87, %v91
    %v96 = vand.u32 2147483647, %v86
    %vm97 = vcmp.eq.f32.partialorder %v96, 8.507059e+37
    %v98 = vand.u32 %v86, 2147483648
    %v99 = vor.u32 1.1754944e-38, %v98
    %v100 = vsel %vm97, %v99, %v95
    %v101 = vmul.f32 1.0, %v100
    %v102 = vpack.c.bf16 %v101, %v101
    %v103 = vld [vmem:[#allocation2] sm:$0xf]
    %v104 = vld [vmem:[#allocation2 + $0x4] sm:$0xf]
    %v105 = vld [vmem:[#allocation2 + $0x8] sm:$0xf]
    %v106 = vld [vmem:[#allocation2 + $0xc] sm:$0xf]
    %v107 = vld [vmem:[%s4] sm:$0x1]
    %v109 = vperm.slane %v107, 0
    %v115 = vunpack.c.l.b16 %v103
    %v116 = vunpack.c.l.b16 %v104
    %v117 = vunpack.c.l.b16 %v105
    %v118 = vunpack.c.l.b16 %v106
    %v119 = vpack.c.b16 %v116, %v115
    %v120 = vpack.c.b16 %v118, %v117
    %v124 = vsel %vm66, %v102, 0
    %126 = vmatpush.bf16.msra.mxu0 0
    %127 = vmatpush.bf16.msra.mxu0 0
    %128 = vmatpush.bf16.msra.mxu0 0
    %129 = vmatpush.bf16.msra.mxu0 0
    %130 = vmatpush.bf16.msra.mxu0 0
    %131 = vmatpush.bf16.msra.mxu0 0
    %132 = vmatpush.bf16.msra.mxu0 %v120
    %133 = vmatpush.bf16.msra.mxu0 %v119
    %134 = vmatmul.bf16.gmra.mxu0 %v124
    %v135 = vpop.f32.mrf.mxu0
    %v136 = vadd.f32 %v109, %v135
    %v137 = vpop.f32.mrf.mxu0
    %138 = vdwg.mxu0
    %v139 = vxor.u32 %v136, 2147483648
    %v140 = vmul.f32 %v139, 1.442695
    %v141 = vpow.pop %v140
    %v142 = vadd.f32 %v141, 1.0
    %v143 = vrcp.pop %v142
    %v144 = vmul.f32 %v142, %v143
    %v145 = vsub.f32 1.0, %v144
    %v146 = vmul.f32 %v143, %v145
    %v147 = vadd.f32 %v143, %v146
    %vm148 = vweird.f32 %v142
    %vm149 = vweird.f32 %v143
    %vm150 = vmor %vm148, %vm149
    %v151 = vsel %vm150, %v143, %v147
    %v152 = vand.u32 2147483647, %v142
    %vm153 = vcmp.eq.f32.partialorder %v152, 8.507059e+37
    %v154 = vand.u32 %v142, 2147483648
    %v155 = vor.u32 1.1754944e-38, %v154
    %v156 = vsel %vm153, %v155, %v151
    %v157 = vmul.f32 1.0, %v156
    %v158 = vpack.c.bf16 %v157, %v157
    %v159 = vld [vmem:[%s5] sm:$0xf]
    %v160 = vld [vmem:[%s5 + $0x4] sm:$0xf]
    %v161 = vld [vmem:[%s5 + $0x8] sm:$0xf]
    %v162 = vld [vmem:[%s5 + $0xc] sm:$0xf]
    %v163 = vld [vmem:[%s6] sm:$0x1]
    %v165 = vperm.slane %v163, 0
    %v171 = vunpack.c.l.b16 %v159
    %v172 = vunpack.c.l.b16 %v160
    %v173 = vunpack.c.l.b16 %v161
    %v174 = vunpack.c.l.b16 %v162
    %v175 = vpack.c.b16 %v172, %v171
    %v176 = vpack.c.b16 %v174, %v173
    %v180 = vsel %vm66, %v158, 0
    %182 = vmatpush.bf16.msra.mxu0 0
    %183 = vmatpush.bf16.msra.mxu0 0
    %184 = vmatpush.bf16.msra.mxu0 0
    %185 = vmatpush.bf16.msra.mxu0 0
    %186 = vmatpush.bf16.msra.mxu0 0
    %187 = vmatpush.bf16.msra.mxu0 0
    %188 = vmatpush.bf16.msra.mxu0 %v176
    %189 = vmatpush.bf16.msra.mxu0 %v175
    %190 = vmatmul.bf16.gmra.mxu0 %v180
    %v191 = vpop.f32.mrf.mxu0
    %v192 = vadd.f32 %v165, %v191
    %v193 = vpop.f32.mrf.mxu0
    %194 = vdwg.mxu0
    %vm195 = vcmask 130048
    %v196 = vsel %vm195, %v192, -inf
    %197 = vmax.xlane.f32.xlu0 %v196
    %v198 = vpop.xlane.xlu0 %197
    %v199 = vsub.f32 %v192, %v198
    %200 = vst.msk [vmem:[#allocation5] sm:$0xff] %vm195, %v199
    // Predicated region
    $region34: #{tpu_custom_call.1} parent=1 // pred_check
      _
    $region35: #{tpu_custom_call.1} parent=1 // pred_check_branch
      %202 = sbr.rel (0) target = $region37
    $region36: #{tpu_custom_call.1} parent=1 // pred_region
      %204 = vsyncadd [#allocation4], 0
      %s206 = sshll.u32 [#allocation5], 4
      %s207 = int_to_ptr.vmem [resolvable:$true] %s206
      %s208 = sshll.u32 %s7, 4
      %s209 = int_to_ptr.hbm [resolvable:$true] %s208
      %211 = dma.vmem_to_hbm [thread:$0]  %s207, 128, %s209, [#allocation4]
    $region37: #{tpu_custom_call.1} parent=1 // pred_fallthru
      _
    // Predicated region
    $region38: #{tpu_custom_call.1} parent=1 // pred_check
      _
    $region39: #{tpu_custom_call.1} parent=1 // pred_check_branch
      %213 = sbr.rel (0) target = $region41
    $region40: #{tpu_custom_call.1} parent=1 // pred_region
      %215 = dma.done [#allocation4], 128
    $region41: #{tpu_custom_call.1} parent=1 // pred_fallthru
      _
    %216 = vsyncpa [#allocation3], 1
    %217 = vsyncpa [#allocation4], 1

</llo_original>
